<compile_context>
chip_gen: v7x
topology: tpu7x:2x2x1
jax: 0.10.0
libtpu: 0.0.40
codegen_flags: <defaults>
</compile_context>

<pallas_src>
import functools
import math

import jax
import jax.numpy as jnp
import numpy as np
from jax import lax
from jax.experimental import pallas as pl
from jax.experimental.pallas import tpu as pltpu


# ----------------------------- kernels --------------------------------------


def _pe_tile(shape, d_model, dtype):
    """Sinusoidal PE values for the current (seq_tile, B*D) tile.

    Lane j corresponds to (batch b, feature d) with d = j % d_model; row r of the
    tile is absolute sequence position program_id(0) * seq_tile + r.
    """
    seq_tile, _ = shape
    base = pl.program_id(0) * seq_tile
    pos = (base + lax.broadcasted_iota(jnp.int32, shape, 0)).astype(jnp.float32)
    lane = lax.broadcasted_iota(jnp.int32, shape, 1)
    d = lane % d_model
    d_even = d - (d % 2)                      # 2 * (d // 2)
    inv_freq = jnp.exp(d_even.astype(jnp.float32) * (-math.log(10000.0) / d_model))
    angle = pos * inv_freq
    pe = jnp.where(d_even == d, jnp.sin(angle), jnp.cos(angle))
    return pe.astype(dtype)


def _add_pe_kernel(x_ref, o_ref, *, d_model):
    """Eval path: out = x + pe (pe computed in-kernel)."""
    o_ref[...] = x_ref[...] + _pe_tile(x_ref.shape, d_model, x_ref.dtype)


def _add_pe_dropout_kernel(x_ref, bits_ref, o_ref, *, d_model, threshold, scale):
    """Training path: inverted dropout on (x + pe). bits are uint8 random bytes."""
    y = x_ref[...] + _pe_tile(x_ref.shape, d_model, x_ref.dtype)
    # keep iff bits >= threshold  ->  P(keep) ~= 1 - p ; compare in int32 (cheap unpack).
    keep = bits_ref[...].astype(jnp.int32) >= threshold
    o_ref[...] = jnp.where(keep, y * scale, jnp.zeros_like(y))


# ----------------------------- helpers --------------------------------------

_ROW_ALIGN = 32  # multiple of the sublane tile for every dtype used here (f32/bf16/u8)


def _choose_seq_tile(S, bytes_per_row, vmem_budget_bytes):
    """Pick a 32-row-aligned seq tile whose working set fits the VMEM budget."""
    max_rows = max(1, vmem_budget_bytes // bytes_per_row)
    if S <= max_rows:
        # Whole sequence fits; still give the grid >= 2 steps when possible so the
        # parallel grid axis can shard across both TensorCores on v7x.
        if S >= 2 * _ROW_ALIGN:
            half = pl.cdiv(S, 2)
            return pl.cdiv(half, _ROW_ALIGN) * _ROW_ALIGN
        return S                                    # full-dim block is always legal
    return max(_ROW_ALIGN, (max_rows // _ROW_ALIGN) * _ROW_ALIGN)


def make_pe_table(d_model, max_len=5000):
    """Same construction as the PyTorch __init__ (shape [max_len, 1, d_model])."""
    position = jnp.arange(max_len, dtype=jnp.float32)[:, None]
    div_term = jnp.exp(jnp.arange(0, d_model, 2, dtype=jnp.float32)
                       * (-math.log(10000.0) / d_model))
    pe = jnp.zeros((max_len, 1, d_model), dtype=jnp.float32)
    pe = pe.at[:, 0, 0::2].set(jnp.sin(position * div_term))
    pe = pe.at[:, 0, 1::2].set(jnp.cos(position * div_term))
    return pe


# ----------------------------- wrapper --------------------------------------


def positional_encoding(x, *, dropout_p=0.1, training=True, rng_key=None,
                        seq_tile=None, vmem_limit_bytes=48 * 1024 * 1024):
    """dropout(x + sinusoidal_pe[:S]) for x of shape [seq_len, batch, d_model]."""
    S, B, D = x.shape
    p = float(dropout_p) if training else 0.0
    if p >= 1.0:                                   # degenerate: everything dropped
        return jnp.zeros_like(x)

    lanes = B * D                                  # lane-dense fold: lane j = b*D + d
    # TODO(synk): if B*D is not a multiple of 128 (tiny demo shapes), stores are
    # masked partial stores; pad the lane axis (or fold as (S*B, D)) for peak BW.
    x2 = x.reshape(S, lanes)

    inputs = [x2]
    # Streamed bytes per sequence row (x read + out write [+ u8 mask]), double
    # buffered, plus single-buffered headroom for the in-kernel f32 PE temporaries.
    itemsize = x2.dtype.itemsize
    bytes_per_row = 2 * lanes * (2 * itemsize + (1 if p > 0.0 else 0)) + 4 * lanes * 4
    if seq_tile is None:
        seq_tile = _choose_seq_tile(S, bytes_per_row, (vmem_limit_bytes * 3) // 4)
    grid = (pl.cdiv(S, seq_tile),)

    block = pl.BlockSpec((seq_tile, lanes), lambda i: (i, 0))
    in_specs = [block]

    if p > 0.0:
        if rng_key is None:
            raise ValueError("rng_key is required when training with dropout_p > 0")
        # uint8 mask: 1 B/elem of HBM traffic instead of 4 B/elem for uint32.
        bits = jax.random.bits(rng_key, (S, lanes), dtype=jnp.uint8)
        inputs.append(bits)
        in_specs.append(pl.BlockSpec((seq_tile, lanes), lambda i: (i, 0)))
        threshold = min(int(round(p * 256.0)), 255)        # keep iff bits >= threshold
        kernel = functools.partial(_add_pe_dropout_kernel, d_model=D,
                                   threshold=threshold, scale=1.0 / (1.0 - p))
    else:
        kernel = functools.partial(_add_pe_kernel, d_model=D)

    out2 = pl.pallas_call(
        kernel,
        out_shape=jax.ShapeDtypeStruct((S, lanes), x.dtype),
        grid=grid,
        in_specs=in_specs,
        out_specs=block,
        # NOTE: no input_output_aliases — it only saves footprint (never HBM traffic)
        # and would require donating x at the jit boundary to take effect anyway.
        compiler_params=pltpu.CompilerParams(
            dimension_semantics=("parallel",),
            vmem_limit_bytes=vmem_limit_bytes),
    )(*inputs)
    return out2.reshape(S, B, D)


# ----------------------------- demo / check ----------------------------------


if __name__ == "__main__":
    # Small shapes consistent with the module: [seq_len, batch, d_model]
    S, B, D = 8, 2, 32
    key = jax.random.PRNGKey(0)
    kx, kdrop = jax.random.split(key)
    x = jax.random.normal(kx, (S, B, D), dtype=jnp.float32)

    ref = x + make_pe_table(D, max_len=5000)[:S]          # (S,1,D) broadcasts over batch

    # 1) eval-mode path (dropout disabled): must equal x + pe[:S]
    y_eval = jax.block_until_ready(
        positional_encoding(x, dropout_p=0.1, training=False))
    np.testing.assert_allclose(np.asarray(y_eval), np.asarray(ref),
                               rtol=1e-5, atol=1e-5)

    # 2) training-mode path (inverted dropout, p = 0.1)
    # TODO(synk): JAX PRNG stream, so masks will not bit-match torch.nn.Dropout
    # (semantics — Bernoulli keep + 1/(1-p) scale — do match).
    p = 0.1
    y_train = jax.block_until_ready(
        positional_encoding(x, dropout_p=p, training=True, rng_key=kdrop))
    assert y_train.shape == (S, B, D)
    y_np, ref_np = np.asarray(y_train), np.asarray(ref)
    kept = y_np != 0.0
    assert kept.any()
    np.testing.assert_allclose(y_np[kept], (ref_np / (1.0 - p))[kept],
                               rtol=1e-5, atol=1e-6)

    print("KERNEL_OK")
</pallas_src>

<mosaic_0001>
module attributes {stable_mosaic.version = 11 : i64} {
  func.func @_add_pe_kernel(%arg0: i32, %arg1: memref<8x64xf32, #tpu.memory_space<vmem>>, %arg2: memref<8x64xf32, #tpu.memory_space<vmem>>) attributes {dimension_semantics = [#tpu.dimension_semantics<parallel>], iteration_bounds = array<i64: 1>, scalar_prefetch = 0 : i64, scratch_operands = 0 : i64, tpu.core_type = #tpu.core_type<tc>, window_params = [{transform_indices = @transform_0, window_bounds = array<i64: 8, 64>}, {transform_indices = @transform_1, window_bounds = array<i64: 8, 64>}]} {
    %c0 = arith.constant 0 : index
    %c0_0 = arith.constant 0 : index
    %0 = vector.load %arg1[%c0, %c0_0] : memref<8x64xf32, #tpu.memory_space<vmem>>, vector<8x64xf32>
    %c8_i32 = arith.constant 8 : i32
    %1 = arith.muli %arg0, %c8_i32 : i32
    %2 = tpu.iota {dimensions = array<i32: 0>} : vector<8x64xi32>
    %3 = vector.broadcast %1 : i32 to vector<8x64xi32>
    %4 = arith.addi %3, %2 : vector<8x64xi32>
    %5 = arith.sitofp %4 : vector<8x64xi32> to vector<8x64xf32>
    %6 = tpu.iota {dimensions = array<i32: 1>} : vector<8x64xi32>
    %c32_i32 = arith.constant 32 : i32
    %c0_i32 = arith.constant 0 : i32
    %7 = arith.cmpi eq, %c32_i32, %c0_i32 : i32
    %c1_i32 = arith.constant 1 : i32
    %8 = arith.select %7, %c1_i32, %c32_i32 : i32
    %9 = vector.broadcast %8 : i32 to vector<8x64xi32>
    %10 = arith.remsi %6, %9 : vector<8x64xi32>
    %c0_i32_1 = arith.constant 0 : i32
    %11 = vector.broadcast %c0_i32_1 : i32 to vector<8x64xi32>
    %12 = arith.cmpi ne, %10, %11 : vector<8x64xi32>
    %c0_i32_2 = arith.constant 0 : i32
    %13 = vector.broadcast %c0_i32_2 : i32 to vector<8x64xi32>
    %14 = arith.cmpi slt, %10, %13 : vector<8x64xi32>
    %c0_i32_3 = arith.constant 0 : i32
    %15 = arith.cmpi slt, %8, %c0_i32_3 : i32
    %16 = vector.broadcast %15 : i1 to vector<8x64xi1>
    %17 = vector.broadcast %16 : vector<8x64xi1> to vector<8x64xi1>
    %18 = arith.xori %14, %17 : vector<8x64xi1>
    %19 = arith.andi %18, %12 : vector<8x64xi1>
    %20 = vector.broadcast %8 : i32 to vector<8x64xi32>
    %21 = arith.addi %10, %20 : vector<8x64xi32>
    %22 = arith.select %19, %21, %10 : vector<8x64xi1>, vector<8x64xi32>
    %c2_i32 = arith.constant 2 : i32
    %c0_i32_4 = arith.constant 0 : i32
    %23 = arith.cmpi eq, %c2_i32, %c0_i32_4 : i32
    %c1_i32_5 = arith.constant 1 : i32
    %24 = arith.select %23, %c1_i32_5, %c2_i32 : i32
    %25 = vector.broadcast %24 : i32 to vector<8x64xi32>
    %26 = arith.remsi %22, %25 : vector<8x64xi32>
    %c0_i32_6 = arith.constant 0 : i32
    %27 = vector.broadcast %c0_i32_6 : i32 to vector<8x64xi32>
    %28 = arith.cmpi ne, %26, %27 : vector<8x64xi32>
    %c0_i32_7 = arith.constant 0 : i32
    %29 = vector.broadcast %c0_i32_7 : i32 to vector<8x64xi32>
    %30 = arith.cmpi slt, %26, %29 : vector<8x64xi32>
    %c0_i32_8 = arith.constant 0 : i32
    %31 = arith.cmpi slt, %24, %c0_i32_8 : i32
    %32 = vector.broadcast %31 : i1 to vector<8x64xi1>
    %33 = vector.broadcast %32 : vector<8x64xi1> to vector<8x64xi1>
    %34 = arith.xori %30, %33 : vector<8x64xi1>
    %35 = arith.andi %34, %28 : vector<8x64xi1>
    %36 = vector.broadcast %24 : i32 to vector<8x64xi32>
    %37 = arith.addi %26, %36 : vector<8x64xi32>
    %38 = arith.select %35, %37, %26 : vector<8x64xi1>, vector<8x64xi32>
    %39 = arith.subi %22, %38 : vector<8x64xi32>
    %40 = arith.sitofp %39 : vector<8x64xi32> to vector<8x64xf32>
    %cst = arith.constant -0.287823141 : f32
    %41 = vector.broadcast %cst : f32 to vector<8x64xf32>
    %42 = arith.mulf %40, %41 : vector<8x64xf32>
    %43 = math.exp %42 : vector<8x64xf32>
    %44 = arith.mulf %5, %43 : vector<8x64xf32>
    %45 = arith.cmpi eq, %39, %22 : vector<8x64xi32>
    %46 = math.sin %44 : vector<8x64xf32>
    %47 = math.cos %44 : vector<8x64xf32>
    %48 = arith.select %45, %46, %47 : vector<8x64xi1>, vector<8x64xf32>
    %49 = arith.addf %0, %48 : vector<8x64xf32>
    %c0_9 = arith.constant 0 : index
    %c0_10 = arith.constant 0 : index
    %50 = vector.load %arg2[%c0_9, %c0_10] : memref<8x64xf32, #tpu.memory_space<vmem>>, vector<8x64xf32>
    tpu.vector_store %arg2[%c0_9, %c0_10], %49 {strides = array<i32>} : memref<8x64xf32, #tpu.memory_space<vmem>>, vector<8x64xf32>,
    return
  }
  func.func @transform_0(%arg0: i32) -> (i32, i32) {
    %c0_i32 = arith.constant 0 : i32
    %c0_i32_0 = arith.constant 0 : i32
    return %arg0, %c0_i32 : i32, i32
  }
  func.func @transform_1(%arg0: i32) -> (i32, i32) {
    %c0_i32 = arith.constant 0 : i32
    %c0_i32_0 = arith.constant 0 : i32
    return %arg0, %c0_i32 : i32, i32
  }
}

</mosaic_0001>

<llo_original>
// kernel: tpu_custom_call.1
$region0: #{tpu_custom_call.1}
  #allocation0 [shape = 'u32[]', space=smem, size = 0x4, offset = 0x4, fixed_abs, tag = 'smem constant byte address 0x4 - core index']
  #allocation1 [shape = 'u32[144,128]{1,0:T(1,128)}', space=vmem, size = 0x12000, scoped, tag = 'internal scratch']
  %s0 = inlined_call_operand.hbm [shape: f32[8,64], index: 0, kind: input, shape index: {}]
  %s1 = inlined_call_operand.hbm [shape: f32[8,64], index: 1, kind: output, shape index: {}]
  %s2 = sld [smem:[#allocation0]]
  $region18: #{tpu_custom_call.1} parent=0
    _
  %s4 = ssub.s32 1, %s2
  %s5 = scalar_select 0, %s4, %s2
  $region1: #{tpu_custom_call.1} parent=0
    #allocation2 [shape = 'u8[4096]{0}', space=vmem, size = 0x1000, scoped, tag = 'input window, operand 0, single buffered']
    #allocation3 [shape = 's32[1]{0}', space=sflag, size = 0x4, scoped, tag = 'scoped memory for tpu_custom_call.1']
    #allocation4 [shape = 's32[1]{0}', space=sflag, size = 0x4, scoped, tag = 'scoped memory for tpu_custom_call.1']
    #allocation5 [shape = 'u8[4096]{0}', space=vmem, size = 0x1000, scoped, tag = 'output window, operand 0, single buffered']
    %6 = vsyncpa [#allocation3], 0
    %7 = vsyncpa [#allocation4], 0
    // Predicated region
    $region2: #{tpu_custom_call.1} parent=1 // pred_check
      _
    $region3: #{tpu_custom_call.1} parent=1 // pred_check_branch
      %9 = sbr.rel (0) target = $region5
    $region4: #{tpu_custom_call.1} parent=1 // pred_region
      %s11 = ssub.s32 128, 128
      %12 = vsyncadd [#allocation3], %s11
      %s14 = sshll.u32 [#allocation2], 4
      %s15 = int_to_ptr.vmem [resolvable:$true] %s14
      %17 = dma.hbm_to_vmem [thread:$0]  %s0, 128, %s15, [#allocation3]
    $region5: #{tpu_custom_call.1} parent=1 // pred_fallthru
      _
    // Predicated region
    $region6: #{tpu_custom_call.1} parent=1 // pred_check
      _
    $region7: #{tpu_custom_call.1} parent=1 // pred_check_branch
      %19 = sbr.rel (0) target = $region9
    $region8: #{tpu_custom_call.1} parent=1 // pred_region
      %20 = dma.done [#allocation3], 128
    $region9: #{tpu_custom_call.1} parent=1 // pred_fallthru
      _
    %v21 = vld [vmem:[#allocation2] sm:$0xff]
    %s22 = smul.u32 0, 8
    %v23 = vlaneseq
    %v24 = vshrl.u32 %v23, 7
    %v25 = vstv %s22
    %v26 = vadd.s32 %v25, %v24
    %v27 = vcvt.s32.f32 %v26
    %v28 = vlaneseq
    %v29 = vand.u32 %v28, 127
    %vm30 = vcmp.lt.s32.totalorder %v29, 0
    %v31 = vsub.s32 0, %v29
    %v32 = vsel %vm30, %v31, %v29
    %v33 = vshrl.u32 %v32, 5
    %v34 = vand.u32 %v32, 31
    %v35 = vsub.s32 0, %v34
    %v36 = vsel %vm30, %v35, %v34
    %vm37 = vcmp.ne.s32.totalorder %v36, 0
    %vm38 = vcmp.lt.s32.totalorder %v36, 0
    %vm39 = vmand %vm38, %vm37
    %v40 = vadd.s32 %v36, 32
    %v41 = vsel %vm39, %v40, %v36
    %vm42 = vcmp.lt.s32.totalorder %v41, 0
    %v43 = vsub.s32 0, %v41
    %v44 = vsel %vm42, %v43, %v41
    %v45 = vshrl.u32 %v44, 1
    %v46 = vand.u32 %v44, 1
    %v47 = vsub.s32 0, %v46
    %v48 = vsel %vm42, %v47, %v46
    %vm49 = vcmp.ne.s32.totalorder %v48, 0
    %vm50 = vcmp.lt.s32.totalorder %v48, 0
    %vm51 = vmand %vm50, %vm49
    %v52 = vadd.s32 %v48, 2
    %v53 = vsel %vm51, %v52, %v48
    %v54 = vsub.s32 %v41, %v53
    %v55 = vcvt.s32.f32 %v54
    %v56 = vmul.f32 %v55, -0.28782314
    %v57 = vmul.f32 %v56, 1.442695
    %v58 = vpow.pop %v57
    %v59 = vmul.f32 %v27, %v58
    %vm60 = vcmp.eq.s32.totalorder %v54, %v41
    %v61 = vand.u32 2147483647, %v59
    %vm62 = vcmp.le.f32.partialorder %v61, 0.7853982
    %vm63 = vcmp.lt.s32.totalorder %v59, 0
    %v64 = vand.u32 %v59, 2139095040
    %v65 = vshrl.u32 %v64, 23
    %v66 = vsub.s32 %v65, 127
    %v67 = vand.u32 2147483647, %v59
    %v68 = vand.u32 %v67, 8388607
    %v69 = vor.u32 %v68, 8388608
    %v70 = vsub.s32 0, %v69
    %v71 = vadd.s32 %v66, 1
    %vm72 = vcmp.gt.s32.totalorder %v71, 0
    %v73 = vsel %vm72, %v71, 0
    %v74 = vshrl.u32 %v73, 5
    %v75 = vand.u32 %v73, 31
    %v76 = vsub.s32 32, %v75
    %v77 = vshrl.u32 683565275, %v76
    %v78 = vshll.u32 683565275, %v75
    %v79 = vshrl.u32 2475754826, %v76
    %v80 = vor.u32 %v78, %v79
    %v81 = vshll.u32 2475754826, %v75
    %v82 = vshrl.u32 2131351028, %v76
    %v83 = vor.u32 %v81, %v82
    %v84 = vshll.u32 2131351028, %v75
    %v85 = vshrl.u32 2102212464, %v76
    %v86 = vor.u32 %v84, %v85
    %v87 = vshll.u32 2102212464, %v75
    %v88 = vshrl.u32 920167782, %v76
    %v89 = vor.u32 %v87, %v88
    %v90 = vshll.u32 920167782, %v75
    %v91 = vshrl.u32 1326507024, %v76
    %v92 = vor.u32 %v90, %v91
    %vm93 = vcmp.lt.s32.totalorder %v74, 1
    %vm94 = vcmp.lt.s32.totalorder %v74, 2
    %vm95 = vcmp.lt.s32.totalorder %v74, 3
    %vm96 = vcmp.lt.s32.totalorder %v74, 4
    %v97 = vsel %vm93, %v77, %v80
    %v98 = vsel %vm96, %v86, 2102212464
    %v99 = vsel %vm95, %v83, %v98
    %v100 = vsel %vm94, %v97, %v99
    %v101 = vsel %vm93, %v80, %v83
    %v102 = vsel %vm96, %v89, 920167782
    %v103 = vsel %vm95, %v86, %v102
    %v104 = vsel %vm94, %v101, %v103
    %v105 = vsel %vm93, %v83, %v86
    %v106 = vsel %vm96, %v92, 1326507024
    %v107 = vsel %vm95, %v89, %v106
    %v108 = vsel %vm94, %v105, %v107
    %v109 = vshll.u32 %v69, 8
    %v110 = vmul.u32.u64.compose %v109, %v108
    %v111 = vextract.low.u32 %v110
    %v112 = vextract.high.u32 %v110
    %v113 = vmul.u32.u64.compose %v109, %v104
    %v114 = vextract.low.u32 %v113
    %v115 = vextract.high.u32 %v113
    %v116 = vmul.u32 %v109, %v100
    %v117 = vadd.s32 %v112, %v114
    %vm118 = vc.u32 %v112, %v114
    %v119 = vadd.s32 %v115, 1
    %v120 = vsel %vm118, %v119, %v115
    %v121 = vadd.s32 %v116, %v120
    %v122 = vadd.s32 %v121, 536870912
    %v123 = vshrl.u32 %v122, 30
    %v124 = vshll.u32 %v123, 30
    %v125 = vsub.s32 %v121, %v124
    %vm126 = vcmp.lt.s32.totalorder %v125, 0
    %v127 = vsub.s32 0, %v125
    %v128 = vsel %vm126, %v127, %v125
    %v129 = vclz %v128
    %v130 = vsub.s32 %v129, 2
    %vm131 = vcmp.gt.s32.totalorder 0, %v130
    %v132 = vsel %vm131, 0, %v130
    %v133 = vsub.s32 32, %v132
    %v134 = vshll.u32 %v125, %v132
    %v135 = vshrl.u32 %v117, %v133
    %v136 = vor.u32 %v134, %v135
    %v137 = vsub.s32 4294967266, %v132
    %v138 = vadd.s32 %v137, 127
    %v139 = vshll.u32 %v138, 23
    %v140 = vor.u32 4788187, %v139
    %v141 = vand.u32 2147483647, %v140
    %v143 = vcvt.s32.f32 %v136
    %v144 = vmul.f32 %v143, %v141
    %v145 = vxor.u32 %v144, 2147483648
    %v146 = vsel %vm63, %v145, %v144
    %v147 = vsub.s32 4, %v123
    %v148 = vsel %vm63, %v147, %v123
    %v149 = vsel %vm62, %v59, %v146
    %v150 = vsel %vm62, 0, %v148
    %v151 = vcosq.f32.pop %v149
    %v152 = vsinq.f32.pop %v149
    %vm153 = vweird.f32 %v59
    %v154 = vadd.s32 %v150, 3
    %v155 = vand.u32 %v154, 3
    %vm156 = vcmp.lt.s32.totalorder %v155, 2
    %vm157 = vcmp.eq.s32.totalorder %v155, 0
    %v158 = vxor.u32 %v152, 2147483648
    %v159 = vsel %vm157, %v151, %v158
    %vm160 = vcmp.eq.s32.totalorder %v155, 2
    %v161 = vxor.u32 %v151, 2147483648
    %v162 = vsel %vm160, %v161, %v152
    %v163 = vsel %vm156, %v159, %v162
    %v164 = vsel %vm153, nan, %v163
    %v165 = vand.u32 2147483647, %v59
    %vm166 = vcmp.le.f32.partialorder %v165, 0.7853982
    %vm167 = vcmp.lt.s32.totalorder %v59, 0
    %v168 = vand.u32 %v59, 2139095040
    %v169 = vshrl.u32 %v168, 23
    %v170 = vsub.s32 %v169, 127
    %v171 = vand.u32 2147483647, %v59
    %v172 = vand.u32 %v171, 8388607
    %v173 = vor.u32 %v172, 8388608
    %v174 = vsub.s32 0, %v173
    %v175 = vadd.s32 %v170, 1
    %vm176 = vcmp.gt.s32.totalorder %v175, 0
    %v177 = vsel %vm176, %v175, 0
    %v178 = vshrl.u32 %v177, 5
    %v179 = vand.u32 %v177, 31
    %v180 = vsub.s32 32, %v179
    %v181 = vshrl.u32 683565275, %v180
    %v182 = vshll.u32 683565275, %v179
    %v183 = vshrl.u32 2475754826, %v180
    %v184 = vor.u32 %v182, %v183
    %v185 = vshll.u32 2475754826, %v179
    %v186 = vshrl.u32 2131351028, %v180
    %v187 = vor.u32 %v185, %v186
    %v188 = vshll.u32 2131351028, %v179
    %v189 = vshrl.u32 2102212464, %v180
    %v190 = vor.u32 %v188, %v189
    %v191 = vshll.u32 2102212464, %v179
    %v192 = vshrl.u32 920167782, %v180
    %v193 = vor.u32 %v191, %v192
    %v194 = vshll.u32 920167782, %v179
    %v195 = vshrl.u32 1326507024, %v180
    %v196 = vor.u32 %v194, %v195
    %vm197 = vcmp.lt.s32.totalorder %v178, 1
    %vm198 = vcmp.lt.s32.totalorder %v178, 2
    %vm199 = vcmp.lt.s32.totalorder %v178, 3
    %vm200 = vcmp.lt.s32.totalorder %v178, 4
    %v201 = vsel %vm197, %v181, %v184
    %v202 = vsel %vm200, %v190, 2102212464
    %v203 = vsel %vm199, %v187, %v202
    %v204 = vsel %vm198, %v201, %v203
    %v205 = vsel %vm197, %v184, %v187
    %v206 = vsel %vm200, %v193, 920167782
    %v207 = vsel %vm199, %v190, %v206
    %v208 = vsel %vm198, %v205, %v207
    %v209 = vsel %vm197, %v187, %v190
    %v210 = vsel %vm200, %v196, 1326507024
    %v211 = vsel %vm199, %v193, %v210
    %v212 = vsel %vm198, %v209, %v211
    %v213 = vshll.u32 %v173, 8
    %v214 = vmul.u32.u64.compose %v213, %v212
    %v215 = vextract.low.u32 %v214
    %v216 = vextract.high.u32 %v214
    %v217 = vmul.u32.u64.compose %v213, %v208
    %v218 = vextract.low.u32 %v217
    %v219 = vextract.high.u32 %v217
    %v220 = vmul.u32 %v213, %v204
    %v221 = vadd.s32 %v216, %v218
    %vm222 = vc.u32 %v216, %v218
    %v223 = vadd.s32 %v219, 1
    %v224 = vsel %vm222, %v223, %v219
    %v225 = vadd.s32 %v220, %v224
    %v226 = vadd.s32 %v225, 536870912
    %v227 = vshrl.u32 %v226, 30
    %v228 = vshll.u32 %v227, 30
    %v229 = vsub.s32 %v225, %v228
    %vm230 = vcmp.lt.s32.totalorder %v229, 0
    %v231 = vsub.s32 0, %v229
    %v232 = vsel %vm230, %v231, %v229
    %v233 = vclz %v232
    %v234 = vsub.s32 %v233, 2
    %vm235 = vcmp.gt.s32.totalorder 0, %v234
    %v236 = vsel %vm235, 0, %v234
    %v237 = vsub.s32 32, %v236
    %v238 = vshll.u32 %v229, %v236
    %v239 = vshrl.u32 %v221, %v237
    %v240 = vor.u32 %v238, %v239
    %v241 = vsub.s32 4294967266, %v236
    %v242 = vadd.s32 %v241, 127
    %v243 = vshll.u32 %v242, 23
    %v244 = vor.u32 4788187, %v243
    %v245 = vand.u32 2147483647, %v244
    %v247 = vcvt.s32.f32 %v240
    %v248 = vmul.f32 %v247, %v245
    %v249 = vxor.u32 %v248, 2147483648
    %v250 = vsel %vm167, %v249, %v248
    %v251 = vsub.s32 4, %v227
    %v252 = vsel %vm167, %v251, %v227
    %v253 = vsel %vm166, %v59, %v250
    %v254 = vsel %vm166, 0, %v252
    %v255 = vcosq.f32.pop %v253
    %v256 = vsinq.f32.pop %v253
    %vm257 = vweird.f32 %v59
    %v258 = vand.u32 %v254, 3
    %vm259 = vcmp.lt.s32.totalorder %v258, 2
    %vm260 = vcmp.eq.s32.totalorder %v258, 0
    %v261 = vxor.u32 %v256, 2147483648
    %v262 = vsel %vm260, %v255, %v261
    %vm263 = vcmp.eq.s32.totalorder %v258, 2
    %v264 = vxor.u32 %v255, 2147483648
    %v265 = vsel %vm263, %v264, %v256
    %v266 = vsel %vm259, %v262, %v265
    %v267 = vsel %vm257, nan, %v266
    %v268 = vsel %vm60, %v164, %v267
    %v269 = vadd.f32 %v21, %v268
    %vm270 = vcmask 523264
    %271 = vst.msk [vmem:[#allocation5] sm:$0xff] %vm270, %v269
    // Predicated region
    $region10: #{tpu_custom_call.1} parent=1 // pred_check
      _
    $region11: #{tpu_custom_call.1} parent=1 // pred_check_branch
      %273 = sbr.rel (0) target = $region13
    $region12: #{tpu_custom_call.1} parent=1 // pred_region
      %s275 = ssub.s32 128, 128
      %276 = vsyncadd [#allocation4], %s275
      %s278 = sshll.u32 [#allocation5], 4
      %s279 = int_to_ptr.vmem [resolvable:$true] %s278
      %281 = dma.vmem_to_hbm [thread:$0]  %s279, 128, %s1, [#allocation4]
    $region13: #{tpu_custom_call.1} parent=1 // pred_fallthru
      _
    // Predicated region
    $region14: #{tpu_custom_call.1} parent=1 // pred_check
      _
    $region15: #{tpu_custom_call.1} parent=1 // pred_check_branch
      %283 = sbr.rel (0) target = $region17
    $region16: #{tpu_custom_call.1} parent=1 // pred_region
      %284 = dma.done [#allocation4], 128
    $region17: #{tpu_custom_call.1} parent=1 // pred_fallthru
      _
    %285 = vsyncpa [#allocation3], 1
    %286 = vsyncpa [#allocation4], 1

</llo_original>
